<compile_context>
chip_gen: v5e
topology: v5e:2x2
jax: 0.10.0
libtpu: 0.0.40
codegen_flags: <defaults>
</compile_context>

<pallas_src>
import functools

import jax
import jax.numpy as jnp
from jax import lax
from jax.experimental import pallas as pl
from jax.experimental.pallas import tpu as pltpu

BN_EPS = 1e-5
_MAX_TILE_L = 2048                     # lane-tile cap for both passes
_DEFAULT_VMEM_BYTES = 64 * 1024 * 1024


def _round_up(x, m):
    return ((x + m - 1) // m) * m


def _vmem_limit_bytes():
    """Generation-aware scoped-VMEM budget (v5e/v6e: 128 MiB phys, v7x: 64 MiB)."""
    try:
        info = pltpu.get_tpu_info()
        cap = int(getattr(info, "vmem_capacity_bytes", _DEFAULT_VMEM_BYTES))
    except Exception:  # not on TPU / API drift -> conservative default
        cap = _DEFAULT_VMEM_BYTES
    budget = (3 * cap) // 4
    return int(min(max(budget, 32 * 1024 * 1024), 100 * 1024 * 1024))


def conv_stats_kernel(x_ref, w_ref, y_ref, stats_ref, sum_sc, sq_sc, *,
                      kernel_size, stride, tile_l, lane_acc, l_out, grid_l):
    """Pass 1: conv tile as ONE MXU matmul + lane-dense partial BN stats.

    x_ref    : (C_in, Lp_total)      whole padded length for this batch element
    w_ref    : (C_out_pad, K*C_in)   weight with taps folded into the contraction dim
    y_ref    : (C_out_pad, TILE_L)   conv output tile (lane-dense in L_out)
    stats_ref: (C_out_pad, 2)        [sum, sum_sq], written ONCE at the last L tile
    sum_sc   : (C_out_pad, LANE_ACC) VMEM scratch, per-lane partial sums
    sq_sc    : (C_out_pad, LANE_ACC) VMEM scratch, per-lane partial sum-of-squares
    """
    jt = pl.program_id(1)

    if grid_l == 1:
        base = 0
    else:
        # tile_l is a multiple of 128 whenever grid_l > 1.
        base = pl.multiple_of(jt * (tile_l * stride), 128)

    # Build the stacked receptive-field window (K*C_in, TILE_L): K statically
    # shifted views of one contiguous window load (stride==1), so the conv is a
    # single matmul with a K*C_in contraction instead of K skinny matmuls.
    if stride == 1:
        win = x_ref[:, pl.ds(base, tile_l + kernel_size - 1)]
        pieces = [win[:, kk:kk + tile_l] for kk in range(kernel_size)]
    else:
        # TODO(synk): for stride > 1, de-stride the window once per tile instead of
        # K strided lane loads.
        pieces = [x_ref[:, pl.ds(base + kk, tile_l, stride)]
                  for kk in range(kernel_size)]
    stacked = pieces[0] if kernel_size == 1 else jnp.concatenate(pieces, axis=0)

    acc = jnp.dot(w_ref[...], stacked, preferred_element_type=jnp.float32)
    y_ref[...] = acc.astype(y_ref.dtype)

    # Mask L_out padding lanes (only present when the L grid is padded).
    if grid_l * tile_l != l_out:
        lane = lax.broadcasted_iota(jnp.int32, acc.shape, 1)
        acc = jnp.where(jt * tile_l + lane < l_out, acc, 0.0)

    @pl.when(jt == 0)
    def _init():
        sum_sc[...] = jnp.zeros_like(sum_sc)
        sq_sc[...] = jnp.zeros_like(sq_sc)

    # Lane-dense partial accumulation: pure VPU adds per tile; cross-lane reduce
    # and the narrow width-2 store happen once per batch element (epilogue).
    for c in range(tile_l // lane_acc):
        a = acc[:, c * lane_acc:(c + 1) * lane_acc]
        sum_sc[...] += a
        sq_sc[...] += a * a

    @pl.when(jt == grid_l - 1)
    def _finalize():
        s = jnp.sum(sum_sc[...], axis=1, keepdims=True)
        q = jnp.sum(sq_sc[...], axis=1, keepdims=True)
        stats_ref[...] = jnp.concatenate([s, q], axis=1)


def bn_relu_kernel(y_ref, scale_ref, shift_ref, o_ref, *, c_out):
    """Pass 2: folded BatchNorm (single FMA) + ReLU, emitted directly unpadded."""
    y = y_ref[0:c_out, :].astype(jnp.float32)
    o_ref[...] = jnp.maximum(y * scale_ref[...] + shift_ref[...], 0.0)


@functools.partial(jax.jit, static_argnames=("stride", "padding", "compute_dtype"))
def conv_block_forward(x, weight, bias, gamma, beta, *, stride, padding,
                       compute_dtype=jnp.bfloat16):
    """ConvBlock.forward (Conv1d + training-mode BatchNorm1d + ReLU) on NCL input.

    x      : (N, C_in, L) float32
    weight : (C_out, C_in, K)
    bias   : (C_out,)  -- cancelled exactly by training-mode (batch-stat) BatchNorm;
                          NOT valid if this kernel is reused with eval-mode stats.
    gamma, beta : (C_out,) BN affine parameters
    compute_dtype : dtype of the matmul inputs and the intermediate-y HBM round-trip
                    (bf16 default; float32 for bit-accurate checks).
    returns: (N, C_out, L_out) float32
    """
    n, c_in, l = x.shape
    c_out, _, k = weight.shape
    l_out = (l + 2 * padding - k) // stride + 1

    # --- tiling ---
    c_out_pad = _round_up(c_out, 8)
    if l_out <= _MAX_TILE_L:
        tile_l = l_out                              # full dim: exempt from (8,128) rule
    else:
        n_tiles = -(-l_out // _MAX_TILE_L)
        tile_l = _round_up(-(-l_out // n_tiles), 128)
    grid_l = -(-l_out // tile_l)
    l_out_pad = grid_l * tile_l
    lane_acc = 128 if tile_l % 128 == 0 else tile_l

    lp0 = l + 2 * padding
    lp_need = stride * (l_out_pad - 1) + k
    extra = max(0, lp_need - lp0)
    lp_total = lp0 + extra

    vmem_limit = _vmem_limit_bytes()
    # TODO(synk): for very long L on v7x (64 MiB VMEM) the whole-length resident x
    # block should be L-tiled with a K-1 halo via manual make_async_copy.

    xp = jnp.pad(x, ((0, 0), (0, 0), (padding, padding + extra))).astype(compute_dtype)

    # weight (C_out, C_in, K) -> (C_out_pad, K*C_in): taps folded into contraction,
    # row order kk*C_in + ci to match the stacked window built in the kernel.
    w2d = jnp.transpose(weight, (0, 2, 1)).reshape(c_out, k * c_in)
    w2d = jnp.pad(w2d, ((0, c_out_pad - c_out), (0, 0))).astype(compute_dtype)

    # Conv bias is a mathematical no-op under training-mode BatchNorm.
    del bias

    kern1 = functools.partial(conv_stats_kernel, kernel_size=k, stride=stride,
                              tile_l=tile_l, lane_acc=lane_acc,
                              l_out=l_out, grid_l=grid_l)
    y, stats = pl.pallas_call(
        kern1,
        grid=(n, grid_l),
        in_specs=[
            pl.BlockSpec((None, c_in, lp_total), lambda b, j: (b, 0, 0)),
            pl.BlockSpec((c_out_pad, k * c_in), lambda b, j: (0, 0)),
        ],
        out_specs=(
            pl.BlockSpec((None, c_out_pad, tile_l), lambda b, j: (b, 0, j)),
            pl.BlockSpec((None, c_out_pad, 2), lambda b, j: (b, 0, 0)),
        ),
        out_shape=(
            jax.ShapeDtypeStruct((n, c_out_pad, l_out_pad), compute_dtype),
            jax.ShapeDtypeStruct((n, c_out_pad, 2), jnp.float32),
        ),
        scratch_shapes=[pltpu.VMEM((c_out_pad, lane_acc), jnp.float32),
                        pltpu.VMEM((c_out_pad, lane_acc), jnp.float32)],
        compiler_params=pltpu.CompilerParams(
            dimension_semantics=("parallel", "arbitrary"),
            vmem_limit_bytes=vmem_limit),
    )(xp, w2d)

    # Fold BN into a single per-channel (scale, shift) -- tiny O(C_out) math in XLA.
    count = jnp.float32(n * l_out)
    ch_sum = jnp.sum(stats[:, :c_out, 0], axis=0)
    ch_sq = jnp.sum(stats[:, :c_out, 1], axis=0)
    mean = ch_sum / count
    # NOTE: E[y^2] - mean^2 in f32 with a non-negativity guard; for extremely
    # poorly-centred activations a shifted / Welford accumulation would be safer.
    var = jnp.maximum(ch_sq / count - mean * mean, 0.0)
    scale = gamma.astype(jnp.float32) * lax.rsqrt(var + BN_EPS)
    shift = beta.astype(jnp.float32) - mean * scale
    scale = scale.reshape(c_out, 1)
    shift = shift.reshape(c_out, 1)

    kern2 = functools.partial(bn_relu_kernel, c_out=c_out)
    out = pl.pallas_call(
        kern2,
        grid=(n, grid_l),
        in_specs=[
            pl.BlockSpec((None, c_out_pad, tile_l), lambda b, j: (b, 0, j)),
            pl.BlockSpec((c_out, 1), lambda b, j: (0, 0)),
            pl.BlockSpec((c_out, 1), lambda b, j: (0, 0)),
        ],
        out_specs=pl.BlockSpec((None, c_out, tile_l), lambda b, j: (b, 0, j)),
        out_shape=jax.ShapeDtypeStruct((n, c_out, l_out), jnp.float32),
        compiler_params=pltpu.CompilerParams(
            dimension_semantics=("parallel", "parallel"),
            vmem_limit_bytes=vmem_limit),
    )(y, scale, shift)

    # Output is already unpadded NCL -- no wrapper slice / extra HBM pass.
    return out


def _reference_forward(x, weight, bias, gamma, beta, *, stride, padding):
    """Pure-JAX reference matching PyTorch Conv1d+BatchNorm1d(train)+ReLU."""
    y = lax.conv_general_dilated(
        x, weight,
        window_strides=(stride,),
        padding=[(padding, padding)],
        dimension_numbers=("NCH", "OIH", "NCH"),
    ) + bias[None, :, None]
    mean = jnp.mean(y, axis=(0, 2), keepdims=True)
    var = jnp.mean((y - mean) ** 2, axis=(0, 2), keepdims=True)
    y = (y - mean) / jnp.sqrt(var + BN_EPS)
    y = y * gamma[None, :, None] + beta[None, :, None]
    return jnp.maximum(y, 0.0)


if __name__ == "__main__":
    # Small shapes consistent with ConvBlock's constructor.
    batch, in_channels, length = 2, 4, 16
    out_channels, kernel_size, stride, padding = 8, 3, 1, 1

    key = jax.random.PRNGKey(0)
    kx, kw, kb = jax.random.split(key, 3)

    x = jax.random.normal(kx, (batch, in_channels, length), dtype=jnp.float32)

    fan_in = in_channels * kernel_size
    bound = 1.0 / (fan_in ** 0.5)
    weight = jax.random.uniform(
        kw, (out_channels, in_channels, kernel_size),
        minval=-bound, maxval=bound, dtype=jnp.float32)
    bias = jax.random.uniform(
        kb, (out_channels,), minval=-bound, maxval=bound, dtype=jnp.float32)
    gamma = jnp.ones((out_channels,), dtype=jnp.float32)   # BN weight init
    beta = jnp.zeros((out_channels,), dtype=jnp.float32)   # BN bias init

    ref = _reference_forward(x, weight, bias, gamma, beta,
                             stride=stride, padding=padding)

    # f32 compute path: bit-accurate check against the reference.
    out_f32 = jax.block_until_ready(conv_block_forward(
        x, weight, bias, gamma, beta, stride=stride, padding=padding,
        compute_dtype=jnp.float32))
    assert out_f32.shape == (batch, out_channels, length), out_f32.shape
    assert jnp.allclose(out_f32, ref, atol=2e-4, rtol=2e-4), "f32 mismatch vs reference"

    # Default bf16 path (bf16 MXU inputs + bf16 intermediate-y round-trip):
    # precision is bounded by bf16 rounding, hence the looser tolerance.
    out_bf16 = jax.block_until_ready(conv_block_forward(
        x, weight, bias, gamma, beta, stride=stride, padding=padding))
    assert out_bf16.shape == (batch, out_channels, length), out_bf16.shape
    assert jnp.allclose(out_bf16, ref, atol=5e-2, rtol=5e-2), "bf16 mismatch vs reference"

    print("KERNEL_OK")
</pallas_src>

<mosaic_0001>
module attributes {stable_mosaic.version = 11 : i64} {
  func.func @conv_stats_kernel(%arg0: i32, %arg1: i32, %arg2: memref<1x4x18xf32, #tpu.memory_space<vmem>>, %arg3: memref<8x12xf32, #tpu.memory_space<vmem>>, %arg4: memref<1x8x16xf32, #tpu.memory_space<vmem>>, %arg5: memref<1x8x2xf32, #tpu.memory_space<vmem>>, %arg6: memref<8x16xf32, #tpu.memory_space<vmem>>, %arg7: memref<8x16xf32, #tpu.memory_space<vmem>>) attributes {dimension_semantics = [#tpu.dimension_semantics<parallel>, #tpu.dimension_semantics<arbitrary>], iteration_bounds = array<i64: 2, 1>, scalar_prefetch = 0 : i64, scratch_operands = 2 : i64, tpu.core_type = #tpu.core_type<tc>, window_params = [{transform_indices = @transform_0, window_bounds = array<i64: 1, 4, 18>}, {pipeline_mode = #tpu.pipeline_mode<synchronous>, transform_indices = @transform_1, window_bounds = array<i64: 8, 12>}, {transform_indices = @transform_2, window_bounds = array<i64: 1, 8, 16>}, {transform_indices = @transform_3, window_bounds = array<i64: 1, 8, 2>}]} {
    %c0 = arith.constant 0 : index
    %c0_0 = arith.constant 0 : index
    %c0_1 = arith.constant 0 : index
    %0 = vector.load %arg2[%c0, %c0_0, %c0_1] : memref<1x4x18xf32, #tpu.memory_space<vmem>>, vector<1x4x18xf32>
    %1 = vector.shape_cast %0 : vector<1x4x18xf32> to vector<4x18xf32>
    %2 = vector.extract_strided_slice %1 {offsets = [0, 0], sizes = [4, 16], strides = [1, 1]} : vector<4x18xf32> to vector<4x16xf32>
    %3 = vector.extract_strided_slice %1 {offsets = [0, 1], sizes = [4, 16], strides = [1, 1]} : vector<4x18xf32> to vector<4x16xf32>
    %4 = vector.extract_strided_slice %1 {offsets = [0, 2], sizes = [4, 16], strides = [1, 1]} : vector<4x18xf32> to vector<4x16xf32>
    %5 = tpu.concatenate %2, %3, %4 in 0 : vector<4x16xf32>, vector<4x16xf32>, vector<4x16xf32> -> vector<12x16xf32>
    %c0_2 = arith.constant 0 : index
    %c0_3 = arith.constant 0 : index
    %6 = vector.load %arg3[%c0_2, %c0_3] : memref<8x12xf32, #tpu.memory_space<vmem>>, vector<8x12xf32>
    %cst = arith.constant dense<0.000000e+00> : vector<8x16xf32>
    %7 = tpu.matmul %6, %5, %cst {dimension_numbers = #tpu.dot_dimension_numbers<[1], [0], [0], [1], [0, 0, 1, 1], [], []>} : vector<8x12xf32>, vector<12x16xf32>, vector<8x16xf32> -> vector<8x16xf32>
    %c0_4 = arith.constant 0 : index
    %c0_5 = arith.constant 0 : index
    %c0_6 = arith.constant 0 : index
    %8 = vector.load %arg4[%c0_4, %c0_5, %c0_6] : memref<1x8x16xf32, #tpu.memory_space<vmem>>, vector<1x8x16xf32>
    %9 = vector.shape_cast %8 : vector<1x8x16xf32> to vector<8x16xf32>
    %10 = vector.shape_cast %7 : vector<8x16xf32> to vector<1x8x16xf32>
    tpu.vector_store %arg4[%c0_4, %c0_5, %c0_6], %10 {strides = array<i32>} : memref<1x8x16xf32, #tpu.memory_space<vmem>>, vector<1x8x16xf32>,
    %c0_i32 = arith.constant 0 : i32
    %11 = arith.cmpi eq, %arg1, %c0_i32 : i32
    %12 = arith.extui %11 : i1 to i32
    %c0_i32_7 = arith.constant 0 : i32
    %13 = arith.cmpi ne, %12, %c0_i32_7 : i32
    scf.if %13 {
      %cst_18 = arith.constant 0.000000e+00 : f32
      %24 = vector.broadcast %cst_18 : f32 to vector<8x16xf32>
      %c0_19 = arith.constant 0 : index
      %c0_20 = arith.constant 0 : index
      %25 = vector.load %arg6[%c0_19, %c0_20] : memref<8x16xf32, #tpu.memory_space<vmem>>, vector<8x16xf32>
      tpu.vector_store %arg6[%c0_19, %c0_20], %24 {strides = array<i32>} : memref<8x16xf32, #tpu.memory_space<vmem>>, vector<8x16xf32>,
      %cst_21 = arith.constant 0.000000e+00 : f32
      %26 = vector.broadcast %cst_21 : f32 to vector<8x16xf32>
      %c0_22 = arith.constant 0 : index
      %c0_23 = arith.constant 0 : index
      %27 = vector.load %arg7[%c0_22, %c0_23] : memref<8x16xf32, #tpu.memory_space<vmem>>, vector<8x16xf32>
      tpu.vector_store %arg7[%c0_22, %c0_23], %26 {strides = array<i32>} : memref<8x16xf32, #tpu.memory_space<vmem>>, vector<8x16xf32>,
    } else {
    }
    %c0_8 = arith.constant 0 : index
    %c0_9 = arith.constant 0 : index
    %14 = vector.load %arg6[%c0_8, %c0_9] : memref<8x16xf32, #tpu.memory_space<vmem>>, vector<8x16xf32>
    %15 = arith.addf %14, %7 : vector<8x16xf32>
    %c0_10 = arith.constant 0 : index
    %c0_11 = arith.constant 0 : index
    %16 = vector.load %arg6[%c0_10, %c0_11] : memref<8x16xf32, #tpu.memory_space<vmem>>, vector<8x16xf32>
    tpu.vector_store %arg6[%c0_10, %c0_11], %15 {strides = array<i32>} : memref<8x16xf32, #tpu.memory_space<vmem>>, vector<8x16xf32>,
    %c0_12 = arith.constant 0 : index
    %c0_13 = arith.constant 0 : index
    %17 = vector.load %arg7[%c0_12, %c0_13] : memref<8x16xf32, #tpu.memory_space<vmem>>, vector<8x16xf32>
    %18 = arith.mulf %7, %7 : vector<8x16xf32>
    %19 = arith.addf %17, %18 : vector<8x16xf32>
    %c0_14 = arith.constant 0 : index
    %c0_15 = arith.constant 0 : index
    %20 = vector.load %arg7[%c0_14, %c0_15] : memref<8x16xf32, #tpu.memory_space<vmem>>, vector<8x16xf32>
    tpu.vector_store %arg7[%c0_14, %c0_15], %19 {strides = array<i32>} : memref<8x16xf32, #tpu.memory_space<vmem>>, vector<8x16xf32>,
    %c0_i32_16 = arith.constant 0 : i32
    %21 = arith.cmpi eq, %arg1, %c0_i32_16 : i32
    %22 = arith.extui %21 : i1 to i32
    %c0_i32_17 = arith.constant 0 : i32
    %23 = arith.cmpi ne, %22, %c0_i32_17 : i32
    scf.if %23 {
      %c0_18 = arith.constant 0 : index
      %c0_19 = arith.constant 0 : index
      %24 = vector.load %arg6[%c0_18, %c0_19] : memref<8x16xf32, #tpu.memory_space<vmem>>, vector<8x16xf32>
      %cst_20 = arith.constant dense<0.000000e+00> : vector<8xf32>
      %25 = vector.multi_reduction <add>, %24, %cst_20 [1] : vector<8x16xf32> to vector<8xf32>
      %26 = vector.shape_cast %25 : vector<8xf32> to vector<8x1xf32>
      %c0_21 = arith.constant 0 : index
      %c0_22 = arith.constant 0 : index
      %27 = vector.load %arg7[%c0_21, %c0_22] : memref<8x16xf32, #tpu.memory_space<vmem>>, vector<8x16xf32>
      %cst_23 = arith.constant dense<0.000000e+00> : vector<8xf32>
      %28 = vector.multi_reduction <add>, %27, %cst_23 [1] : vector<8x16xf32> to vector<8xf32>
      %29 = vector.shape_cast %28 : vector<8xf32> to vector<8x1xf32>
      %30 = tpu.concatenate %26, %29 in 1 : vector<8x1xf32>, vector<8x1xf32> -> vector<8x2xf32>
      %c0_24 = arith.constant 0 : index
      %c0_25 = arith.constant 0 : index
      %c0_26 = arith.constant 0 : index
      %31 = vector.load %arg5[%c0_24, %c0_25, %c0_26] : memref<1x8x2xf32, #tpu.memory_space<vmem>>, vector<1x8x2xf32>
      %32 = vector.shape_cast %31 : vector<1x8x2xf32> to vector<8x2xf32>
      %33 = vector.shape_cast %30 : vector<8x2xf32> to vector<1x8x2xf32>
      tpu.vector_store %arg5[%c0_24, %c0_25, %c0_26], %33 {strides = array<i32>} : memref<1x8x2xf32, #tpu.memory_space<vmem>>, vector<1x8x2xf32>,
    } else {
    }
    return
  }
  func.func @transform_0(%arg0: i32, %arg1: i32) -> (i32, i32, i32) {
    %c0_i32 = arith.constant 0 : i32
    %c0_i32_0 = arith.constant 0 : i32
    %c0_i32_1 = arith.constant 0 : i32
    return %arg0, %c0_i32, %c0_i32_0 : i32, i32, i32
  }
  func.func @transform_1(%arg0: i32, %arg1: i32) -> (i32, i32) {
    %c0_i32 = arith.constant 0 : i32
    %c0_i32_0 = arith.constant 0 : i32
    %c0_i32_1 = arith.constant 0 : i32
    return %c0_i32, %c0_i32_0 : i32, i32
  }
  func.func @transform_2(%arg0: i32, %arg1: i32) -> (i32, i32, i32) {
    %c0_i32 = arith.constant 0 : i32
    %c0_i32_0 = arith.constant 0 : i32
    return %arg0, %c0_i32, %arg1 : i32, i32, i32
  }
  func.func @transform_3(%arg0: i32, %arg1: i32) -> (i32, i32, i32) {
    %c0_i32 = arith.constant 0 : i32
    %c0_i32_0 = arith.constant 0 : i32
    %c0_i32_1 = arith.constant 0 : i32
    return %arg0, %c0_i32, %c0_i32_0 : i32, i32, i32
  }
}

module attributes {stable_mosaic.version = 11 : i64} {
  func.func @bn_relu_kernel(%arg0: i32, %arg1: i32, %arg2: memref<1x8x16xf32, #tpu.memory_space<vmem>>, %arg3: memref<8x1xf32, #tpu.memory_space<vmem>>, %arg4: memref<8x1xf32, #tpu.memory_space<vmem>>, %arg5: memref<1x8x16xf32, #tpu.memory_space<vmem>>) attributes {dimension_semantics = [#tpu.dimension_semantics<parallel>, #tpu.dimension_semantics<parallel>], iteration_bounds = array<i64: 2, 1>, scalar_prefetch = 0 : i64, scratch_operands = 0 : i64, tpu.core_type = #tpu.core_type<tc>, window_params = [{transform_indices = @transform_0, window_bounds = array<i64: 1, 8, 16>}, {pipeline_mode = #tpu.pipeline_mode<synchronous>, transform_indices = @transform_1, window_bounds = array<i64: 8, 1>}, {pipeline_mode = #tpu.pipeline_mode<synchronous>, transform_indices = @transform_2, window_bounds = array<i64: 8, 1>}, {transform_indices = @transform_3, window_bounds = array<i64: 1, 8, 16>}]} {
    %c0 = arith.constant 0 : index
    %c0_0 = arith.constant 0 : index
    %c0_1 = arith.constant 0 : index
    %0 = vector.load %arg2[%c0, %c0_0, %c0_1] : memref<1x8x16xf32, #tpu.memory_space<vmem>>, vector<1x8x16xf32>
    %1 = vector.shape_cast %0 : vector<1x8x16xf32> to vector<8x16xf32>
    %c0_2 = arith.constant 0 : index
    %c0_3 = arith.constant 0 : index
    %2 = vector.load %arg3[%c0_2, %c0_3] : memref<8x1xf32, #tpu.memory_space<vmem>>, vector<8x1xf32>
    %3 = vector.broadcast %2 : vector<8x1xf32> to vector<8x16xf32>
    %4 = arith.mulf %1, %3 : vector<8x16xf32>
    %c0_4 = arith.constant 0 : index
    %c0_5 = arith.constant 0 : index
    %5 = vector.load %arg4[%c0_4, %c0_5] : memref<8x1xf32, #tpu.memory_space<vmem>>, vector<8x1xf32>
    %6 = vector.broadcast %5 : vector<8x1xf32> to vector<8x16xf32>
    %7 = arith.addf %4, %6 : vector<8x16xf32>
    %cst = arith.constant 0.000000e+00 : f32
    %8 = vector.broadcast %cst : f32 to vector<8x16xf32>
    %9 = arith.maximumf %7, %8 : vector<8x16xf32>
    %c0_6 = arith.constant 0 : index
    %c0_7 = arith.constant 0 : index
    %c0_8 = arith.constant 0 : index
    %10 = vector.load %arg5[%c0_6, %c0_7, %c0_8] : memref<1x8x16xf32, #tpu.memory_space<vmem>>, vector<1x8x16xf32>
    %11 = vector.shape_cast %10 : vector<1x8x16xf32> to vector<8x16xf32>
    %12 = vector.shape_cast %9 : vector<8x16xf32> to vector<1x8x16xf32>
    tpu.vector_store %arg5[%c0_6, %c0_7, %c0_8], %12 {strides = array<i32>} : memref<1x8x16xf32, #tpu.memory_space<vmem>>, vector<1x8x16xf32>,
    return
  }
  func.func @transform_0(%arg0: i32, %arg1: i32) -> (i32, i32, i32) {
    %c0_i32 = arith.constant 0 : i32
    %c0_i32_0 = arith.constant 0 : i32
    return %arg0, %c0_i32, %arg1 : i32, i32, i32
  }
  func.func @transform_1(%arg0: i32, %arg1: i32) -> (i32, i32) {
    %c0_i32 = arith.constant 0 : i32
    %c0_i32_0 = arith.constant 0 : i32
    %c0_i32_1 = arith.constant 0 : i32
    return %c0_i32, %c0_i32_0 : i32, i32
  }
  func.func @transform_2(%arg0: i32, %arg1: i32) -> (i32, i32) {
    %c0_i32 = arith.constant 0 : i32
    %c0_i32_0 = arith.constant 0 : i32
    %c0_i32_1 = arith.constant 0 : i32
    return %c0_i32, %c0_i32_0 : i32, i32
  }
  func.func @transform_3(%arg0: i32, %arg1: i32) -> (i32, i32, i32) {
    %c0_i32 = arith.constant 0 : i32
    %c0_i32_0 = arith.constant 0 : i32
    return %arg0, %c0_i32, %arg1 : i32, i32, i32
  }
}

</mosaic_0001>

<llo_original>
// kernel: conv_block_forward.3
$region0: #{conv_block_forward.3}
  #allocation0 [shape = 'u32[]', space=smem, size = 0x4, offset = 0x4, fixed_abs, tag = 'smem constant byte address 0x4 - core index']
  #allocation1 [shape = 'u32[72,128]{1,0:T(1,128)}', space=vmem, size = 0x9000, scoped, tag = 'internal scratch']
  %s0 = inlined_call_operand.vmem [shape: f32[2,8,16], index: 0, kind: input, shape index: {}]
  %s1 = inlined_call_operand.vmem [shape: f32[8,1], index: 1, kind: input, shape index: {}]
  %s2 = inlined_call_operand.vmem [shape: f32[8,1], index: 2, kind: input, shape index: {}]
  %s3 = inlined_call_operand.hbm [shape: f32[2,8,16], index: 3, kind: output, shape index: {}]
  %s4 = sld [smem:[#allocation0]]
  $region45: #{conv_block_forward.3} parent=0
    _
  %s6 = ssub.s32 1, %s4
  %s7 = scalar_select 0, %s6, %s4
  $region1: #{conv_block_forward.3} parent=0
    #allocation2 [shape = 'u8[8192]{0}', space=vmem, size = 0x2000, scoped, tag = 'output window, operand 0']
    #allocation3 [shape = 's32[2]{0}', space=sflag, size = 0x8, scoped, tag = 'scoped memory for conv_block_forward.3']
    %8 = vsyncpa [#allocation3], 0
    %s9 = scalar_lea.sflag [#allocation3], 1
    %10 = vsyncpa %s9, 0
    loop: start=0, step=1, limit=4
    $region2: #{conv_block_forward.3} parent=1 // loop_pre_header
      _
    $region3: #{conv_block_forward.3} parent=1 // loop_header
      %s12 = sphi 0, %s16
      %p13 = scmp.ge.s32.totalorder %s12, 4
      %s19 = sphi 0, %s31
      %s20 = sphi 0, %s27
      %s21 = sphi 0, %s19
      %s22 = sphi 0, %s20
      %s23 = sphi 0, %s21
      %s24 = sphi 0, %s22
      %s36 = sphi 0, %s38
      %s39 = sphi 0, %s36
      %s40 = sphi 0, %s39
      %s56 = sphi 0, %s40
      %s60 = sphi 0, %s60
      %s62 = sphi 0, %s60
      %s63 = sphi 0, %s62
      %s77 = sphi 0, %s63
      %s81 = sphi 0, %s81
      %s83 = sphi 0, %s81
      %s84 = sphi 0, %s83
      %s98 = sphi 0, %s84
      %s106 = sphi 0, %s108
      %s109 = sphi 0, %s106
      %s110 = sphi 0, %s109
      %s126 = sphi 0, %s110
    $region4: #{conv_block_forward.3} parent=1 // loop_header_branch
      %15 = sbr.rel (%p13) target = $region8
    $region5: #{conv_block_forward.3} parent=1 // loop_body
      %s17 = ssub.s32 %s12, 1
      %s18 = ssub.s32 %s12, 2
      %s25 = sadd.s32 1, %s20
      %p26 = scmp.ge.s32.totalorder %s25, 1
      %s27 = scalar_select %p26, 0, %s25
      %s28 = sadd.s32 1, %s19
      %s29 = scalar_select %p26, %s28, %s19
      %p30 = scmp.ge.s32.totalorder %s29, 2
      %s31 = scalar_select %p30, 0, %s29
      %s32 = ssub.s32 %s19, %s31
      %s33 = ssub.s32 %s20, %s27
      %s34 = sor.u32 %s32, %s33
      %p35 = scmp.eq.s32.totalorder %s34, 0
      %s37 = sadd.s32 %s36, 1
      %s38 = scalar_select %p35, %s36, %s37
      %p41 = pneg %p35
      %p42 = scmp.eq.s32.totalorder %s12, 1
      %p43 = por %p41, %p42
      %p44 = scmp.ne.s32.totalorder %s36, %s39
      %p45 = scmp.eq.s32.totalorder %s12, 0
      %p46 = por %p44, %p45
      %p47 = scmp.ne.s32.totalorder %s36, %s39
      %p48 = scmp.eq.s32.totalorder %s17, 1
      %p49 = por %p47, %p48
      %p50 = scmp.ne.s32.totalorder %s39, %s40
      %p51 = scmp.eq.s32.totalorder %s17, 0
      %p52 = por %p50, %p51
      %p53 = scmp.ne.s32.totalorder %s39, %s40
      %p54 = scmp.eq.s32.totalorder %s18, 1
      %p55 = por %p53, %p54
      %p57 = scmp.ne.s32.totalorder %s40, %s56
      %p58 = scmp.eq.s32.totalorder %s18, 0
      %p59 = por %p57, %p58
      %s61 = sadd.s32 %s60, 1
      %p64 = scmp.eq.s32.totalorder %s12, 1
      %p65 = scmp.ne.s32.totalorder %s60, %s62
      %p66 = scmp.eq.s32.totalorder %s12, 0
      %p67 = por %p65, %p66
      %p68 = scmp.ne.s32.totalorder %s60, %s62
      %p69 = scmp.eq.s32.totalorder %s17, 1
      %p70 = por %p68, %p69
      %p71 = scmp.ne.s32.totalorder %s62, %s63
      %p72 = scmp.eq.s32.totalorder %s17, 0
      %p73 = por %p71, %p72
      %p74 = scmp.ne.s32.totalorder %s62, %s63
      %p75 = scmp.eq.s32.totalorder %s18, 1
      %p76 = por %p74, %p75
      %p78 = scmp.ne.s32.totalorder %s63, %s77
      %p79 = scmp.eq.s32.totalorder %s18, 0
      %p80 = por %p78, %p79
      %s82 = sadd.s32 %s81, 1
      %p85 = scmp.eq.s32.totalorder %s12, 1
      %p86 = scmp.ne.s32.totalorder %s81, %s83
      %p87 = scmp.eq.s32.totalorder %s12, 0
      %p88 = por %p86, %p87
      %p89 = scmp.ne.s32.totalorder %s81, %s83
      %p90 = scmp.eq.s32.totalorder %s17, 1
      %p91 = por %p89, %p90
      %p92 = scmp.ne.s32.totalorder %s83, %s84
      %p93 = scmp.eq.s32.totalorder %s17, 0
      %p94 = por %p92, %p93
      %p95 = scmp.ne.s32.totalorder %s83, %s84
      %p96 = scmp.eq.s32.totalorder %s18, 1
      %p97 = por %p95, %p96
      %p99 = scmp.ne.s32.totalorder %s84, %s98
      %p100 = scmp.eq.s32.totalorder %s18, 0
      %p101 = por %p99, %p100
      %s102 = ssub.s32 %s19, %s31
      %s103 = ssub.s32 %s20, %s27
      %s104 = sor.u32 %s102, %s103
      %p105 = scmp.eq.s32.totalorder %s104, 0
      %s107 = sadd.s32 %s106, 1
      %s108 = scalar_select %p105, %s106, %s107
      %p111 = pneg %p105
      %p112 = scmp.eq.s32.totalorder %s12, 1
      %p113 = por %p111, %p112
      %p114 = scmp.ne.s32.totalorder %s106, %s109
      %p115 = scmp.eq.s32.totalorder %s12, 0
      %p116 = por %p114, %p115
      %p117 = scmp.ne.s32.totalorder %s106, %s109
      %p118 = scmp.eq.s32.totalorder %s17, 1
      %p119 = por %p117, %p118
      %p120 = scmp.ne.s32.totalorder %s109, %s110
      %p121 = scmp.eq.s32.totalorder %s17, 0
      %p122 = por %p120, %p121
      %p123 = scmp.ne.s32.totalorder %s109, %s110
      %p124 = scmp.eq.s32.totalorder %s18, 1
      %p125 = por %p123, %p124
      %p127 = scmp.ne.s32.totalorder %s110, %s126
      %p128 = scmp.eq.s32.totalorder %s18, 0
      %p129 = por %p127, %p128
      %p130 = scmp.le.s32.totalorder 1, %s12
      %p131 = scmp.lt.s32.totalorder %s12, 3
      %p132 = pnand %p130, %p131
      %p133 = pneg %p132
      // Predicated region
      $region9: #{conv_block_forward.3} parent=5 // pred_check
        _
      $region10: #{conv_block_forward.3} parent=5 // pred_check_branch
        %135 = sbr.rel (%p132) target = $region12
      $region11: #{conv_block_forward.3} parent=5 // pred_region
        %s136 = ssub.s32 %s12, 1
        // Predicated region
        $region13: #{conv_block_forward.3} parent=11 // pred_check
          %p137 = pneg %p73
        $region14: #{conv_block_forward.3} parent=11 // pred_check_branch
          %139 = sbr.rel (%p137) target = $region16
        $region15: #{conv_block_forward.3} parent=11 // pred_region
          _
        $region16: #{conv_block_forward.3} parent=11 // pred_fallthru
          _
        // Predicated region
        $region17: #{conv_block_forward.3} parent=11 // pred_check
          %p140 = pneg %p94
        $region18: #{conv_block_forward.3} parent=11 // pred_check_branch
          %142 = sbr.rel (%p140) target = $region20
        $region19: #{conv_block_forward.3} parent=11 // pred_region
          _
        $region20: #{conv_block_forward.3} parent=11 // pred_fallthru
          _
      $region12: #{conv_block_forward.3} parent=5 // pred_fallthru
        _
      %p143 = scmp.lt.s32.totalorder %s12, 2
      // Predicated region
      $region21: #{conv_block_forward.3} parent=5 // pred_check
        %p144 = pneg %p143
      $region22: #{conv_block_forward.3} parent=5 // pred_check_branch
        %146 = sbr.rel (%p144) target = $region24
      $region23: #{conv_block_forward.3} parent=5 // pred_region
        // Predicated region
        $region25: #{conv_block_forward.3} parent=23 // pred_check
          %p147 = pneg %p46
        $region26: #{conv_block_forward.3} parent=23 // pred_check_branch
          %149 = sbr.rel (%p147) target = $region28
        $region27: #{conv_block_forward.3} parent=23 // pred_region
          %p150 = scmp.lt.s32.totalorder %s19, 1
          %s151 = scalar_select %p150, %s19, 1
          %p152 = scmp.lt.s32.totalorder %s20, 0
          %s153 = scalar_select %p152, %s20, 0
          %s154 = sadd.s32 %s153, %s151
          %s155 = smul.addr %s154, 8
          %s156 = scalar_lea.vmem %s0, %s155
        $region28: #{conv_block_forward.3} parent=23 // pred_fallthru
          _
      $region24: #{conv_block_forward.3} parent=5 // pred_fallthru
        _
      %p157 = scmp.le.s32.totalorder 1, %s12
      %p158 = scmp.lt.s32.totalorder %s12, 3
      %p159 = pnand %p157, %p158
      %p160 = pneg %p159
      // Predicated region
      $region29: #{conv_block_forward.3} parent=5 // pred_check
        _
      $region30: #{conv_block_forward.3} parent=5 // pred_check_branch
        %162 = sbr.rel (%p159) target = $region32
      $region31: #{conv_block_forward.3} parent=5 // pred_region
        %s163 = ssub.s32 %s12, 1
        %p164 = scmp.lt.s32.totalorder %s21, 1
        %s165 = scalar_select %p164, %s21, 1
        %p166 = scmp.lt.s32.totalorder %s22, 0
        %s167 = scalar_select %p166, %s22, 0
        %s168 = sadd.s32 %s167, %s165
        %s169 = smul.addr %s168, 8
        %s170 = scalar_lea.vmem %s0, %s169
        %p171 = pneg %p52
        %p172 = pneg %p49
        %p173 = pneg %p73
        %p174 = pneg %p70
        %p175 = pneg %p94
        %p176 = pneg %p91
        %p177 = pneg %p122
        %p178 = pneg %p119
        %s179 = sand.u32 %s109, 1
        %s180 = scalar_lea.sflag [#allocation3], %s179
        %s181 = sand.u32 %s109, 1
        %s182 = smul.addr %s181, 8
        %s183 = scalar_lea.vmem [#allocation2], %s182
        %p184 = scmp.lt.s32.totalorder %s21, 1
        %s185 = scalar_select %p184, %s21, 1
        %p186 = scmp.lt.s32.totalorder %s22, 0
        %s187 = scalar_select %p186, %s22, 0
        %s188 = sadd.s32 %s187, %s185
        %s189 = smul.addr %s188, 8
        %s190 = scalar_lea.vmem %s0, %s189
        %v191 = vld [vmem:[%s190] sm:$0xff]
        %v192 = vld [vmem:[%s1] sm:$0xff]
        %194 = vset.pattern.permute.xlu0 0
        %195 = vperm.xlu0 %194, %v192
        %v196 = vpop.permute.xlu0 %195
        %v198 = vmul.f32 %v191, %v196
        %v199 = vld [vmem:[%s2] sm:$0xff]
        %201 = vset.pattern.permute.xlu0 0
        %202 = vperm.xlu0 %201, %v199
        %v203 = vpop.permute.xlu0 %202
        %v205 = vadd.f32 %v198, %v203
        %v206 = vmax.f32 %v205, 0.0
        %vm207 = vcmask 130048
        %208 = vst.msk [vmem:[%s183] sm:$0xff] %vm207, %v206
        %s209 = sand.u32 %s109, 1
        %s210 = scalar_lea.sflag [#allocation3], %s209
        %s211 = sand.u32 %s109, 1
        %s212 = smul.addr %s211, 8
        %s213 = scalar_lea.vmem [#allocation2], %s212
        // Predicated region
        $region33: #{conv_block_forward.3} parent=31 // pred_check
          %p214 = pneg %p119
        $region34: #{conv_block_forward.3} parent=31 // pred_check_branch
          %216 = sbr.rel (%p214) target = $region36
        $region35: #{conv_block_forward.3} parent=31 // pred_region
          %218 = vsyncadd %s210, 0
          %s219 = sadd.s32 %s22, %s21
          %s220 = smul.addr %s219, 8
          %s221 = scalar_lea.hbm %s3, %s220
          %s223 = sshll.u32 %s213, 4
          %s224 = int_to_ptr.vmem [resolvable:$true] %s223
          %s225 = sshll.u32 %s221, 4
          %s226 = int_to_ptr.hbm [resolvable:$true] %s225
          %228 = dma.vmem_to_hbm [thread:$0]  %s224, 128, %s226, %s210
        $region36: #{conv_block_forward.3} parent=31 // pred_fallthru
          _
      $region32: #{conv_block_forward.3} parent=5 // pred_fallthru
        _
      %p229 = scmp.le.s32.totalorder 2, %s12
      // Predicated region
      $region37: #{conv_block_forward.3} parent=5 // pred_check
        %p230 = pneg %p229
      $region38: #{conv_block_forward.3} parent=5 // pred_check_branch
        %232 = sbr.rel (%p230) target = $region40
      $region39: #{conv_block_forward.3} parent=5 // pred_region
        %s233 = ssub.s32 %s12, 2
        // Predicated region
        $region41: #{conv_block_forward.3} parent=39 // pred_check
          %p234 = pneg %p125
        $region42: #{conv_block_forward.3} parent=39 // pred_check_branch
          %236 = sbr.rel (%p234) target = $region44
        $region43: #{conv_block_forward.3} parent=39 // pred_region
          %s237 = sand.u32 %s110, 1
          %s238 = scalar_lea.sflag [#allocation3], %s237
          %s239 = sand.u32 %s110, 1
          %s240 = smul.addr %s239, 8
          %s241 = scalar_lea.vmem [#allocation2], %s240
          %243 = dma.done %s238, 128
        $region44: #{conv_block_forward.3} parent=39 // pred_fallthru
          _
      $region40: #{conv_block_forward.3} parent=5 // pred_fallthru
        _
    $region6: #{conv_block_forward.3} parent=1 // loop_footer
      %s16 = sadd.s32 1, %s12
    $region7: #{conv_block_forward.3} parent=1 // loop_footer_branch
      %11 = sbr.rel target = $region3
    $region8: #{conv_block_forward.3} parent=1 // loop_exit
      _
    %244 = vsyncpa [#allocation3], 1
    %s245 = scalar_lea.sflag [#allocation3], 1
    %246 = vsyncpa %s245, 1

// kernel: conv_block_forward.2
$region0: #{conv_block_forward.2}
  #allocation0 [shape = 'u32[]', space=smem, size = 0x4, offset = 0x4, fixed_abs, tag = 'smem constant byte address 0x4 - core index']
  #allocation1 [shape = 'u32[72,128]{1,0:T(1,128)}', space=vmem, size = 0x9000, scoped, tag = 'internal scratch']
  #allocation2 [shape = 'f32[8,16]{1,0:T(8,128)}', space=vmem, size = 0x1000, scoped, tag = 'scratch operand']
  #allocation3 [shape = 'f32[8,16]{1,0:T(8,128)}', space=vmem, size = 0x1000, scoped, tag = 'scratch operand']
  %s0 = inlined_call_operand.vmem [shape: f32[2,4,18], index: 0, kind: input, shape index: {}]
  %s1 = inlined_call_operand.vmem [shape: f32[8,12], index: 1, kind: input, shape index: {}]
  %s2 = inlined_call_operand.vmem [shape: f32[2,8,16], index: 2, kind: output, shape index: {0}]
  %s3 = inlined_call_operand.vmem [shape: f32[2,8,2], index: 3, kind: output, shape index: {1}]
  %4 = xla_tuple %s2, %s3
  %s5 = sld [smem:[#allocation0]]
  $region57: #{conv_block_forward.2} parent=0
    _
  %s7 = ssub.s32 1, %s5
  %s8 = scalar_select 0, %s7, %s5
  loop: start=0, step=1, limit=4
  $region2: #{conv_block_forward.2} parent=0 // loop_pre_header
    _
  $region3: #{conv_block_forward.2} parent=0 // loop_header
    %s10 = sphi 0, %s14
    %p11 = scmp.ge.s32.totalorder %s10, 4
    %s17 = sphi 0, %s29
    %s18 = sphi 0, %s25
    %s19 = sphi 0, %s17
    %s20 = sphi 0, %s18
    %s21 = sphi 0, %s19
    %s22 = sphi 0, %s20
    %s32 = sphi 0, %s34
    %s35 = sphi 0, %s32
    %s36 = sphi 0, %s35
    %s52 = sphi 0, %s36
    %s56 = sphi 0, %s56
    %s58 = sphi 0, %s56
    %s59 = sphi 0, %s58
    %s73 = sphi 0, %s59
    %s81 = sphi 0, %s83
    %s84 = sphi 0, %s81
    %s85 = sphi 0, %s84
    %s101 = sphi 0, %s85
    %s107 = sphi 0, %s109
    %s110 = sphi 0, %s107
    %s111 = sphi 0, %s110
    %s127 = sphi 0, %s111
  $region4: #{conv_block_forward.2} parent=0 // loop_header_branch
    %13 = sbr.rel (%p11) target = $region8
  $region5: #{conv_block_forward.2} parent=0 // loop_body
    %s15 = ssub.s32 %s10, 1
    %s16 = ssub.s32 %s10, 2
    %s23 = sadd.s32 1, %s18
    %p24 = scmp.ge.s32.totalorder %s23, 1
    %s25 = scalar_select %p24, 0, %s23
    %s26 = sadd.s32 1, %s17
    %s27 = scalar_select %p24, %s26, %s17
    %p28 = scmp.ge.s32.totalorder %s27, 2
    %s29 = scalar_select %p28, 0, %s27
    %s30 = ssub.s32 %s17, %s29
    %p31 = scmp.eq.s32.totalorder %s30, 0
    %s33 = sadd.s32 %s32, 1
    %s34 = scalar_select %p31, %s32, %s33
    %p37 = pneg %p31
    %p38 = scmp.eq.s32.totalorder %s10, 1
    %p39 = por %p37, %p38
    %p40 = scmp.ne.s32.totalorder %s32, %s35
    %p41 = scmp.eq.s32.totalorder %s10, 0
    %p42 = por %p40, %p41
    %p43 = scmp.ne.s32.totalorder %s32, %s35
    %p44 = scmp.eq.s32.totalorder %s15, 1
    %p45 = por %p43, %p44
    %p46 = scmp.ne.s32.totalorder %s35, %s36
    %p47 = scmp.eq.s32.totalorder %s15, 0
    %p48 = por %p46, %p47
    %p49 = scmp.ne.s32.totalorder %s35, %s36
    %p50 = scmp.eq.s32.totalorder %s16, 1
    %p51 = por %p49, %p50
    %p53 = scmp.ne.s32.totalorder %s36, %s52
    %p54 = scmp.eq.s32.totalorder %s16, 0
    %p55 = por %p53, %p54
    %s57 = sadd.s32 %s56, 1
    %p60 = scmp.eq.s32.totalorder %s10, 1
    %p61 = scmp.ne.s32.totalorder %s56, %s58
    %p62 = scmp.eq.s32.totalorder %s10, 0
    %p63 = por %p61, %p62
    %p64 = scmp.ne.s32.totalorder %s56, %s58
    %p65 = scmp.eq.s32.totalorder %s15, 1
    %p66 = por %p64, %p65
    %p67 = scmp.ne.s32.totalorder %s58, %s59
    %p68 = scmp.eq.s32.totalorder %s15, 0
    %p69 = por %p67, %p68
    %p70 = scmp.ne.s32.totalorder %s58, %s59
    %p71 = scmp.eq.s32.totalorder %s16, 1
    %p72 = por %p70, %p71
    %p74 = scmp.ne.s32.totalorder %s59, %s73
    %p75 = scmp.eq.s32.totalorder %s16, 0
    %p76 = por %p74, %p75
    %s77 = ssub.s32 %s17, %s29
    %s78 = ssub.s32 %s18, %s25
    %s79 = sor.u32 %s77, %s78
    %p80 = scmp.eq.s32.totalorder %s79, 0
    %s82 = sadd.s32 %s81, 1
    %s83 = scalar_select %p80, %s81, %s82
    %p86 = pneg %p80
    %p87 = scmp.eq.s32.totalorder %s10, 1
    %p88 = por %p86, %p87
    %p89 = scmp.ne.s32.totalorder %s81, %s84
    %p90 = scmp.eq.s32.totalorder %s10, 0
    %p91 = por %p89, %p90
    %p92 = scmp.ne.s32.totalorder %s81, %s84
    %p93 = scmp.eq.s32.totalorder %s15, 1
    %p94 = por %p92, %p93
    %p95 = scmp.ne.s32.totalorder %s84, %s85
    %p96 = scmp.eq.s32.totalorder %s15, 0
    %p97 = por %p95, %p96
    %p98 = scmp.ne.s32.totalorder %s84, %s85
    %p99 = scmp.eq.s32.totalorder %s16, 1
    %p100 = por %p98, %p99
    %p102 = scmp.ne.s32.totalorder %s85, %s101
    %p103 = scmp.eq.s32.totalorder %s16, 0
    %p104 = por %p102, %p103
    %s105 = ssub.s32 %s17, %s29
    %p106 = scmp.eq.s32.totalorder %s105, 0
    %s108 = sadd.s32 %s107, 1
    %s109 = scalar_select %p106, %s107, %s108
    %p112 = pneg %p106
    %p113 = scmp.eq.s32.totalorder %s10, 1
    %p114 = por %p112, %p113
    %p115 = scmp.ne.s32.totalorder %s107, %s110
    %p116 = scmp.eq.s32.totalorder %s10, 0
    %p117 = por %p115, %p116
    %p118 = scmp.ne.s32.totalorder %s107, %s110
    %p119 = scmp.eq.s32.totalorder %s15, 1
    %p120 = por %p118, %p119
    %p121 = scmp.ne.s32.totalorder %s110, %s111
    %p122 = scmp.eq.s32.totalorder %s15, 0
    %p123 = por %p121, %p122
    %p124 = scmp.ne.s32.totalorder %s110, %s111
    %p125 = scmp.eq.s32.totalorder %s16, 1
    %p126 = por %p124, %p125
    %p128 = scmp.ne.s32.totalorder %s111, %s127
    %p129 = scmp.eq.s32.totalorder %s16, 0
    %p130 = por %p128, %p129
    %p131 = scmp.le.s32.totalorder 1, %s10
    %p132 = scmp.lt.s32.totalorder %s10, 3
    %p133 = pnand %p131, %p132
    %p134 = pneg %p133
    // Predicated region
    $region9: #{conv_block_forward.2} parent=5 // pred_check
      _
    $region10: #{conv_block_forward.2} parent=5 // pred_check_branch
      %136 = sbr.rel (%p133) target = $region12
    $region11: #{conv_block_forward.2} parent=5 // pred_region
      %s137 = ssub.s32 %s10, 1
      // Predicated region
      $region13: #{conv_block_forward.2} parent=11 // pred_check
        %p138 = pneg %p69
      $region14: #{conv_block_forward.2} parent=11 // pred_check_branch
        %140 = sbr.rel (%p138) target = $region16
      $region15: #{conv_block_forward.2} parent=11 // pred_region
        _
      $region16: #{conv_block_forward.2} parent=11 // pred_fallthru
        _
    $region12: #{conv_block_forward.2} parent=5 // pred_fallthru
      _
    %p141 = scmp.lt.s32.totalorder %s10, 2
    // Predicated region
    $region17: #{conv_block_forward.2} parent=5 // pred_check
      %p142 = pneg %p141
    $region18: #{conv_block_forward.2} parent=5 // pred_check_branch
      %144 = sbr.rel (%p142) target = $region20
    $region19: #{conv_block_forward.2} parent=5 // pred_region
      // Predicated region
      $region21: #{conv_block_forward.2} parent=19 // pred_check
        %p145 = pneg %p42
      $region22: #{conv_block_forward.2} parent=19 // pred_check_branch
        %147 = sbr.rel (%p145) target = $region24
      $region23: #{conv_block_forward.2} parent=19 // pred_region
        %p148 = scmp.lt.s32.totalorder %s17, 1
        %s149 = scalar_select %p148, %s17, 1
        %s150 = smul.addr %s149, 4
        %s151 = scalar_lea.vmem %s0, %s150
      $region24: #{conv_block_forward.2} parent=19 // pred_fallthru
        _
    $region20: #{conv_block_forward.2} parent=5 // pred_fallthru
      _
    %p152 = scmp.le.s32.totalorder 1, %s10
    %p153 = scmp.lt.s32.totalorder %s10, 3
    %p154 = pnand %p152, %p153
    %p155 = pneg %p154
    // Predicated region
    $region25: #{conv_block_forward.2} parent=5 // pred_check
      _
    $region26: #{conv_block_forward.2} parent=5 // pred_check_branch
      %157 = sbr.rel (%p154) target = $region28
    $region27: #{conv_block_forward.2} parent=5 // pred_region
      %s158 = ssub.s32 %s10, 1
      %p159 = scmp.lt.s32.totalorder %s19, 1
      %s160 = scalar_select %p159, %s19, 1
      %s161 = smul.addr %s160, 4
      %s162 = scalar_lea.vmem %s0, %s161
      %p163 = pneg %p48
      %p164 = pneg %p45
      %p165 = pneg %p69
      %p166 = pneg %p66
      %p167 = pneg %p97
      %p168 = pneg %p94
      %p169 = scmp.lt.s32.totalorder %s19, 1
      %s170 = scalar_select %p169, %s19, 1
      %p171 = scmp.lt.s32.totalorder %s20, 0
      %s172 = scalar_select %p171, %s20, 0
      %s173 = sadd.s32 %s172, %s170
      %s174 = smul.addr %s173, 8
      %s175 = scalar_lea.vmem %s2, %s174
      %p176 = pneg %p123
      %p177 = pneg %p120
      %p178 = scmp.lt.s32.totalorder %s19, 1
      %s179 = scalar_select %p178, %s19, 1
      %s180 = smul.addr %s179, 8
      %s181 = scalar_lea.vmem %s3, %s180
      %p182 = scmp.lt.s32.totalorder %s19, 1
      %s183 = scalar_select %p182, %s19, 1
      %s184 = smul.addr %s183, 4
      %s185 = scalar_lea.vmem %s0, %s184
      %p186 = scmp.lt.s32.totalorder %s19, 1
      %s187 = scalar_select %p186, %s19, 1
      %p188 = scmp.lt.s32.totalorder %s20, 0
      %s189 = scalar_select %p188, %s20, 0
      %s190 = sadd.s32 %s189, %s187
      %s191 = smul.addr %s190, 8
      %s192 = scalar_lea.vmem %s2, %s191
      %p193 = scmp.lt.s32.totalorder %s19, 1
      %s194 = scalar_select %p193, %s19, 1
      %s195 = smul.addr %s194, 8
      %s196 = scalar_lea.vmem %s3, %s195
      %v197 = vld [vmem:[%s185] sm:$0xf]
      %v199 = vrot.slane %v197, 4
      %200 = vrot.lane.b32.xlu0 %v199, 127
      %v201 = vpop.permute.xlu0 %200
      %203 = vrot.lane.b32.xlu0 %v197, 126
      %v204 = vpop.permute.xlu0 %203
      %vm205 = vcmask 1043456
      %v206 = vsel %vm205, %v197, %v201
      %v207 = vld [vmem:[%s1] sm:$0xff]
      %vm208 = vcmask 97280
      %v210 = vsel %vm208, %v207, 0
      %v212 = vsel %vm205, %v204, 0
      %214 = vmatpush.msra.mxu0 0.0
      %215 = vmatpush.msra.mxu0 0.0
      %216 = vmatpush.msra.mxu0 0.0
      %217 = vmatpush.msra.mxu0 0.0
      %218 = vmatpush.msra.mxu0 0.0
      %219 = vmatpush.msra.mxu0 0.0
      %220 = vmatpush.msra.mxu0 0.0
      %221 = vmatpush.msra.mxu0 0.0
      %222 = vmatpush.msra.mxu0 0.0
      %223 = vmatpush.msra.mxu0 0.0
      %224 = vmatpush.msra.mxu0 0.0
      %225 = vmatpush.msra.mxu0 0.0
      %226 = vmatpush.msra.mxu0 0.0
      %227 = vmatpush.msra.mxu0 0.0
      %228 = vmatpush.msra.mxu0 %v212
      %229 = vmatpush.msra.mxu0 %v206
      %230 = vmatmul.f32.gmra.mxu0 %v210
      %v231 = vpop.f32.mrf.mxu0
      %v232 = vadd.f32 0.0, %v231
      %233 = vdwg.mxu0
      %vm234 = vcmask 130048
      %235 = vst.msk [vmem:[%s192] sm:$0xff] %vm234, %v232
      %p236 = scmp.eq.s32.totalorder %s20, 0
      // Predicated region
      $region29: #{conv_block_forward.2} parent=27 // pred_check
        %p237 = pneg %p236
      $region30: #{conv_block_forward.2} parent=27 // pred_check_branch
        %239 = sbr.rel (%p237) target = $region32
      $region31: #{conv_block_forward.2} parent=27 // pred_region
        %240 = vst.msk [vmem:[#allocation2] sm:$0xff] %vm234, 0.0
        %241 = vst.msk [vmem:[#allocation3] sm:$0xff] %vm234, 0.0
      $region32: #{conv_block_forward.2} parent=27 // pred_fallthru
        _
      %v242 = vld [vmem:[#allocation2] sm:$0xff]
      %v243 = vadd.f32 %v242, %v232
      %244 = vst.msk [vmem:[#allocation2] sm:$0xff] %vm234, %v243
      %v245 = vld [vmem:[#allocation3] sm:$0xff]
      %v246 = vmul.f32 %v232, %v232
      %v247 = vadd.f32 %v245, %v246
      %248 = vst.msk [vmem:[#allocation3] sm:$0xff] %vm234, %v247
      // Predicated region
      $region33: #{conv_block_forward.2} parent=27 // pred_check
        %p249 = pneg %p236
      $region34: #{conv_block_forward.2} parent=27 // pred_check_branch
        %251 = sbr.rel (%p249) target = $region36
      $region35: #{conv_block_forward.2} parent=27 // pred_region
        %v252 = vld [vmem:[#allocation2] sm:$0xff]
        %v253 = vsel %vm234, %v252, 0.0
        %254 = vadd.xlane.f32.xlu0 %v253
        %v255 = vpop.xlane.xlu0 %254
        %v256 = vld [vmem:[#allocation3] sm:$0xff]
        %v257 = vsel %vm234, %v256, 0.0
        %258 = vadd.xlane.f32.xlu0 %v257
        %v259 = vpop.xlane.xlu0 %258
        %vm260 = vcmask 7168
        %v261 = vsel %vm260, %v255, %v259
        %vm262 = vcmask 15360
        %263 = vst.msk [vmem:[%s196] sm:$0xff] %vm262, %v261
      $region36: #{conv_block_forward.2} parent=27 // pred_fallthru
        _
      %p264 = scmp.lt.s32.totalorder %s19, 1
      %s265 = scalar_select %p264, %s19, 1
      %p266 = scmp.lt.s32.totalorder %s20, 0
      %s267 = scalar_select %p266, %s20, 0
      %s268 = sadd.s32 %s267, %s265
      %s269 = smul.addr %s268, 8
      %s270 = scalar_lea.vmem %s2, %s269
      %p271 = scmp.lt.s32.totalorder %s19, 1
      %s272 = scalar_select %p271, %s19, 1
      %s273 = smul.addr %s272, 8
      %s274 = scalar_lea.vmem %s3, %s273
      // Predicated region
      $region37: #{conv_block_forward.2} parent=27 // pred_check
        %p275 = pneg %p94
      $region38: #{conv_block_forward.2} parent=27 // pred_check_branch
        %277 = sbr.rel (%p275) target = $region40
      $region39: #{conv_block_forward.2} parent=27 // pred_region
        _
      $region40: #{conv_block_forward.2} parent=27 // pred_fallthru
        _
      // Predicated region
      $region41: #{conv_block_forward.2} parent=27 // pred_check
        %p278 = pneg %p120
      $region42: #{conv_block_forward.2} parent=27 // pred_check_branch
        %280 = sbr.rel (%p278) target = $region44
      $region43: #{conv_block_forward.2} parent=27 // pred_region
        _
      $region44: #{conv_block_forward.2} parent=27 // pred_fallthru
        _
    $region28: #{conv_block_forward.2} parent=5 // pred_fallthru
      _
    %p281 = scmp.le.s32.totalorder 2, %s10
    // Predicated region
    $region45: #{conv_block_forward.2} parent=5 // pred_check
      %p282 = pneg %p281
    $region46: #{conv_block_forward.2} parent=5 // pred_check_branch
      %284 = sbr.rel (%p282) target = $region48
    $region47: #{conv_block_forward.2} parent=5 // pred_region
      %s285 = ssub.s32 %s10, 2
      // Predicated region
      $region49: #{conv_block_forward.2} parent=47 // pred_check
        %p286 = pneg %p100
      $region50: #{conv_block_forward.2} parent=47 // pred_check_branch
        %288 = sbr.rel (%p286) target = $region52
      $region51: #{conv_block_forward.2} parent=47 // pred_region
        %p289 = scmp.lt.s32.totalorder %s21, 1
        %s290 = scalar_select %p289, %s21, 1
        %p291 = scmp.lt.s32.totalorder %s22, 0
        %s292 = scalar_select %p291, %s22, 0
        %s293 = sadd.s32 %s292, %s290
        %s294 = smul.addr %s293, 8
        %s295 = scalar_lea.vmem %s2, %s294
      $region52: #{conv_block_forward.2} parent=47 // pred_fallthru
        _
      // Predicated region
      $region53: #{conv_block_forward.2} parent=47 // pred_check
        %p296 = pneg %p126
      $region54: #{conv_block_forward.2} parent=47 // pred_check_branch
        %298 = sbr.rel (%p296) target = $region56
      $region55: #{conv_block_forward.2} parent=47 // pred_region
        %p299 = scmp.lt.s32.totalorder %s21, 1
        %s300 = scalar_select %p299, %s21, 1
        %s301 = smul.addr %s300, 8
        %s302 = scalar_lea.vmem %s3, %s301
      $region56: #{conv_block_forward.2} parent=47 // pred_fallthru
        _
    $region48: #{conv_block_forward.2} parent=5 // pred_fallthru
      _
  $region6: #{conv_block_forward.2} parent=0 // loop_footer
    %s14 = sadd.s32 1, %s10
  $region7: #{conv_block_forward.2} parent=0 // loop_footer_branch
    %9 = sbr.rel target = $region3
  $region8: #{conv_block_forward.2} parent=0 // loop_exit
    _

</llo_original>
